<compile_context>
chip_gen: v6e
topology: v6e:2x2x1
jax: 0.10.0
libtpu: 0.0.40
codegen_flags: <defaults>
</compile_context>

<pallas_src>
import jax
import jax.numpy as jnp
from jax.experimental import pallas as pl
from jax.experimental.pallas import tpu as pltpu

_LANES = 128
_SUB = 8


def _ztot_kernel(c_ref, z_ref, o_ref):
    # c_ref (SMEM): [4*t0, 4*t1, 5*t2, 5*t1 + pi/2, 4**t2 + 2]
    a0 = c_ref[0]
    a1 = c_ref[1]
    p_sin = c_ref[2]
    p_cos = c_ref[3]   # cos folded into sin via +pi/2 phase
    bias = c_ref[4]
    z = z_ref[...]
    o_ref[...] = (jnp.sin(z * 7.0 + p_sin) * a0
                  + jnp.sin(z * 12.0 + p_cos) * a1
                  + bias)


def _make_consts(theta):
    th = theta.astype(jnp.float32)
    t0, t1, t2 = th[0], th[1], th[2]
    return jnp.stack([
        4.0 * t0,                          # sin coeff with trailing *4 folded in
        4.0 * t1,                          # cos coeff with trailing *4 folded in
        5.0 * t2,                          # sin phase
        5.0 * t1 + jnp.float32(jnp.pi / 2.0),  # cos -> sin phase fold
        jnp.exp2(2.0 * t2) + 2.0,          # 4**t2 + 2, no in-kernel pow
    ])


def _tail_formula(z_tail, consts):
    # Same algebra as the kernel, for the <128-element unaligned remainder.
    return (jnp.sin(z_tail * 7.0 + consts[2]) * consts[0]
            + jnp.sin(z_tail * 12.0 + consts[3]) * consts[1]
            + consts[4])


def _pick_tile(rows, tile_rows):
    """Pick a row-tile size: one block if it fits, else an even number of
    near-equal, 8-row-aligned blocks (balanced across v7x's 2 TCs; no forced
    shrinking on single-TC v5e/v6e)."""
    if rows <= tile_rows:
        return rows, 1
    n = pl.cdiv(rows, tile_rows)
    if n % 2:
        n += 1  # even step count -> balanced megacore sharding on v7x
    tm = max(_SUB, pl.cdiv(pl.cdiv(rows, n), _SUB) * _SUB)
    return tm, pl.cdiv(rows, tm)


def ztot_forward(z, theta, *, tile_rows=2048):
    """Pallas implementation of ZtoT.forward.

    z:     float array of arbitrary shape (e.g. NCHW).
    theta: float array of shape (3,).
    returns: float32 array of shape z.shape + (1,).
    """
    orig_shape = z.shape
    total = int(z.size)
    consts = _make_consts(theta)

    zflat = z.reshape(-1).astype(jnp.float32)
    rows = total // _LANES
    rem = total - rows * _LANES

    if rows == 0:
        # Tiny input (< 128 elements): plain XLA, no kernel launch needed.
        out_flat = _tail_formula(zflat, consts)
        return out_flat.reshape(orig_shape)[..., None]

    main = rows * _LANES
    # When total % 128 == 0 this reshape is a free bitcast (no copy).
    z2d = zflat[:main].reshape(rows, _LANES) if rem else zflat.reshape(rows, _LANES)

    tm, grid = _pick_tile(rows, tile_rows)

    out2d = pl.pallas_call(
        _ztot_kernel,
        out_shape=jax.ShapeDtypeStruct((rows, _LANES), jnp.float32),
        grid_spec=pltpu.PrefetchScalarGridSpec(
            num_scalar_prefetch=0,
            grid=(grid,),
            in_specs=[
                pl.BlockSpec(memory_space=pltpu.MemorySpace.SMEM),  # consts (5,)
                pl.BlockSpec((tm, _LANES), lambda i: (i, 0)),       # z tile
            ],
            out_specs=pl.BlockSpec((tm, _LANES), lambda i: (i, 0)),
        ),
        compiler_params=pltpu.CompilerParams(
            dimension_semantics=("parallel",),
        ),
    )(consts, z2d)

    if rem:
        # <128-element tail handled by plain XLA; avoids any pad/slice copy
        # of the full array around the kernel.
        out_tail = _tail_formula(zflat[main:], consts)
        out_flat = jnp.concatenate([out2d.reshape(-1), out_tail])
    else:
        out_flat = out2d.reshape(-1)

    return out_flat.reshape(orig_shape)[..., None]


def _ztot_ref(z, theta):
    t0, t1, t2 = theta[0], theta[1], theta[2]
    z = z.astype(jnp.float32)
    y = jnp.sin(z * 7.0 + t2 * 5.0) * t0 + jnp.cos(z * 12.0 + t1 * 5.0) * t1
    return (y * 4.0 + 4.0 ** t2 + 2.0)[..., None]


if __name__ == "__main__":
    theta = jnp.array([0.5, 0.2, 0.7], dtype=jnp.float32)  # module default init

    # NCHW-style input, small shape, total divisible by 128 (common case).
    z = jax.random.normal(jax.random.PRNGKey(0), (2, 4, 16, 16), dtype=jnp.float32)
    out = jax.block_until_ready(ztot_forward(z, theta))
    ref = _ztot_ref(z, theta)
    assert out.shape == z.shape + (1,)
    assert jnp.allclose(out, ref, atol=1e-5, rtol=1e-5)

    # Unaligned total (1155 elems): 128-aligned prefix via kernel + XLA tail.
    z2 = jax.random.normal(jax.random.PRNGKey(1), (3, 5, 7, 11), dtype=jnp.float32)
    out2 = jax.block_until_ready(ztot_forward(z2, theta))
    assert out2.shape == z2.shape + (1,)
    assert jnp.allclose(out2, _ztot_ref(z2, theta), atol=1e-5, rtol=1e-5)

    # Larger slab to exercise the multi-step (even-grid) tiling path.
    z3 = jax.random.normal(jax.random.PRNGKey(2), (2, 16, 128, 128), dtype=jnp.float32)
    out3 = jax.block_until_ready(ztot_forward(z3, theta))
    assert out3.shape == z3.shape + (1,)
    assert jnp.allclose(out3, _ztot_ref(z3, theta), atol=1e-5, rtol=1e-5)

    print("KERNEL_OK")
</pallas_src>

<mosaic_0001>
module attributes {stable_mosaic.version = 11 : i64} {
  func.func @_ztot_kernel(%arg0: i32, %arg1: memref<5xf32, #tpu.memory_space<smem>>, %arg2: memref<16x128xf32, #tpu.memory_space<vmem>>, %arg3: memref<16x128xf32, #tpu.memory_space<vmem>>) attributes {dimension_semantics = [#tpu.dimension_semantics<parallel>], iteration_bounds = array<i64: 1>, scalar_prefetch = 0 : i64, scratch_operands = 0 : i64, tpu.core_type = #tpu.core_type<tc>, window_params = [{transform_indices = @transform_0, window_bounds = array<i64: 5>}, {transform_indices = @transform_1, window_bounds = array<i64: 16, 128>}, {transform_indices = @transform_2, window_bounds = array<i64: 16, 128>}]} {
    %c0 = arith.constant 0 : index
    %0 = memref.load %arg1[%c0] : memref<5xf32, #tpu.memory_space<smem>>
    %c1 = arith.constant 1 : index
    %1 = memref.load %arg1[%c1] : memref<5xf32, #tpu.memory_space<smem>>
    %c2 = arith.constant 2 : index
    %2 = memref.load %arg1[%c2] : memref<5xf32, #tpu.memory_space<smem>>
    %c3 = arith.constant 3 : index
    %3 = memref.load %arg1[%c3] : memref<5xf32, #tpu.memory_space<smem>>
    %c4 = arith.constant 4 : index
    %4 = memref.load %arg1[%c4] : memref<5xf32, #tpu.memory_space<smem>>
    %c0_0 = arith.constant 0 : index
    %c0_1 = arith.constant 0 : index
    %5 = vector.load %arg2[%c0_0, %c0_1] : memref<16x128xf32, #tpu.memory_space<vmem>>, vector<16x128xf32>
    %cst = arith.constant 7.000000e+00 : f32
    %6 = vector.broadcast %cst : f32 to vector<16x128xf32>
    %7 = arith.mulf %5, %6 : vector<16x128xf32>
    %8 = vector.broadcast %2 : f32 to vector<16x128xf32>
    %9 = arith.addf %7, %8 : vector<16x128xf32>
    %10 = math.sin %9 : vector<16x128xf32>
    %11 = vector.broadcast %0 : f32 to vector<16x128xf32>
    %12 = arith.mulf %10, %11 : vector<16x128xf32>
    %cst_2 = arith.constant 1.200000e+01 : f32
    %13 = vector.broadcast %cst_2 : f32 to vector<16x128xf32>
    %14 = arith.mulf %5, %13 : vector<16x128xf32>
    %15 = vector.broadcast %3 : f32 to vector<16x128xf32>
    %16 = arith.addf %14, %15 : vector<16x128xf32>
    %17 = math.sin %16 : vector<16x128xf32>
    %18 = vector.broadcast %1 : f32 to vector<16x128xf32>
    %19 = arith.mulf %17, %18 : vector<16x128xf32>
    %20 = arith.addf %12, %19 : vector<16x128xf32>
    %21 = vector.broadcast %4 : f32 to vector<16x128xf32>
    %22 = arith.addf %20, %21 : vector<16x128xf32>
    %c0_3 = arith.constant 0 : index
    %c0_4 = arith.constant 0 : index
    %23 = vector.load %arg3[%c0_3, %c0_4] : memref<16x128xf32, #tpu.memory_space<vmem>>, vector<16x128xf32>
    tpu.vector_store %arg3[%c0_3, %c0_4], %22 {strides = array<i32>} : memref<16x128xf32, #tpu.memory_space<vmem>>, vector<16x128xf32>,
    return
  }
  func.func @transform_0(%arg0: i32) -> i32 {
    %c0_i32 = arith.constant 0 : i32
    %c0_i32_0 = arith.constant 0 : i32
    return %c0_i32 : i32
  }
  func.func @transform_1(%arg0: i32) -> (i32, i32) {
    %c0_i32 = arith.constant 0 : i32
    %c0_i32_0 = arith.constant 0 : i32
    return %arg0, %c0_i32 : i32, i32
  }
  func.func @transform_2(%arg0: i32) -> (i32, i32) {
    %c0_i32 = arith.constant 0 : i32
    %c0_i32_0 = arith.constant 0 : i32
    return %arg0, %c0_i32 : i32, i32
  }
}

</mosaic_0001>

<llo_original>
// kernel: tpu_custom_call.1
$region0: #{tpu_custom_call.1}
  #allocation0 [shape = 'u32[]', space=smem, size = 0x4, offset = 0x4, fixed_abs, tag = 'smem constant byte address 0x4 - core index']
  #allocation1 [shape = 'u32[144,128]{1,0:T(1,128)}', space=vmem, size = 0x12000, scoped, tag = 'internal scratch']
  %s0 = inlined_call_operand.hbm [shape: f32[5], index: 0, kind: input, shape index: {}]
  %s1 = inlined_call_operand.hbm [shape: f32[16,128], index: 1, kind: input, shape index: {}]
  %s2 = inlined_call_operand.hbm [shape: f32[16,128], index: 2, kind: output, shape index: {}]
  %s3 = sld [smem:[#allocation0]]
  $region26: #{tpu_custom_call.1} parent=0
    _
  %s5 = ssub.s32 1, %s3
  %s6 = scalar_select 0, %s5, %s3
  $region1: #{tpu_custom_call.1} parent=0
    #allocation2 [shape = 'u8[512]{0}', space=smem, size = 0x200, scoped, tag = 'input window, operand 0, single buffered']
    #allocation3 [shape = 's32[1]{0}', space=sflag, size = 0x4, scoped, tag = 'scoped memory for tpu_custom_call.1']
    #allocation4 [shape = 's32[1]{0}', space=sflag, size = 0x4, scoped, tag = 'scoped memory for tpu_custom_call.1']
    #allocation5 [shape = 's32[1]{0}', space=sflag, size = 0x4, scoped, tag = 'scoped memory for tpu_custom_call.1']
    #allocation6 [shape = 'u8[8192]{0}', space=vmem, size = 0x2000, scoped, tag = 'input window, operand 1, single buffered']
    #allocation7 [shape = 'u8[8192]{0}', space=vmem, size = 0x2000, scoped, tag = 'output window, operand 0, single buffered']
    %7 = vsyncpa [#allocation5], 0
    %8 = vsyncpa [#allocation3], 0
    %9 = vsyncpa [#allocation4], 0
    // Predicated region
    $region2: #{tpu_custom_call.1} parent=1 // pred_check
      _
    $region3: #{tpu_custom_call.1} parent=1 // pred_check_branch
      %11 = sbr.rel (0) target = $region5
    $region4: #{tpu_custom_call.1} parent=1 // pred_region
      %s13 = ssub.s32 16, 16
      %14 = vsyncadd [#allocation5], %s13
      %17 = dma.hbm_to_smem %s0, 16, [#allocation2], [#allocation5]
    $region5: #{tpu_custom_call.1} parent=1 // pred_fallthru
      _
    // Predicated region
    $region6: #{tpu_custom_call.1} parent=1 // pred_check
      _
    $region7: #{tpu_custom_call.1} parent=1 // pred_check_branch
      %19 = sbr.rel (0) target = $region9
    $region8: #{tpu_custom_call.1} parent=1 // pred_region
      %s21 = ssub.s32 256, 256
      %22 = vsyncadd [#allocation3], %s21
      %s23 = sshll.u32 [#allocation6], 4
      %s24 = int_to_ptr.vmem [resolvable:$true] %s23
      %29 = dma.hbm_to_vmem [thread:$0]  %s1, 256, %s24, [#allocation3], 128, 128, 8
    $region9: #{tpu_custom_call.1} parent=1 // pred_fallthru
      _
    // Predicated region
    $region10: #{tpu_custom_call.1} parent=1 // pred_check
      _
    $region11: #{tpu_custom_call.1} parent=1 // pred_check_branch
      %31 = sbr.rel (0) target = $region13
    $region12: #{tpu_custom_call.1} parent=1 // pred_region
      %32 = dma.done [#allocation5], 16
    $region13: #{tpu_custom_call.1} parent=1 // pred_fallthru
      _
    // Predicated region
    $region14: #{tpu_custom_call.1} parent=1 // pred_check
      _
    $region15: #{tpu_custom_call.1} parent=1 // pred_check_branch
      %34 = sbr.rel (0) target = $region17
    $region16: #{tpu_custom_call.1} parent=1 // pred_region
      %35 = dma.done [#allocation3], 256
    $region17: #{tpu_custom_call.1} parent=1 // pred_fallthru
      _
    %36 = sfence
    %s37 = sld [smem:[#allocation2]]
    %s38 = sld [smem:[#allocation2 + $0x1]]
    %s39 = sld [smem:[#allocation2 + $0x2]]
    %s40 = sld [smem:[#allocation2 + $0x3]]
    %s41 = sld [smem:[#allocation2 + $0x4]]
    %v42 = vld [vmem:[#allocation6] sm:$0xff]
    %v43 = vld [vmem:[#allocation6 + $0x8] sm:$0xff]
    %v44 = vmul.f32 %v42, 7.0
    %v45 = vmul.f32 %v43, 7.0
    %v46 = vstv %s39
    %v47 = vadd.f32 %v44, %v46
    %v48 = vadd.f32 %v45, %v46
    %v49 = vand.u32 2147483647, %v47
    %vm50 = vcmp.le.f32.partialorder %v49, 0.7853982
    %vm51 = vcmp.lt.s32.totalorder %v47, 0
    %v52 = vand.u32 %v47, 2139095040
    %v53 = vshrl.u32 %v52, 23
    %v54 = vsub.s32 %v53, 127
    %v55 = vand.u32 2147483647, %v47
    %v56 = vand.u32 %v55, 8388607
    %v57 = vor.u32 %v56, 8388608
    %v58 = vsub.s32 0, %v57
    %v59 = vadd.s32 %v54, 1
    %vm60 = vcmp.gt.s32.totalorder %v59, 0
    %v61 = vsel %vm60, %v59, 0
    %v62 = vshrl.u32 %v61, 5
    %v63 = vand.u32 %v61, 31
    %v64 = vsub.s32 32, %v63
    %v65 = vshrl.u32 683565275, %v64
    %v66 = vshll.u32 683565275, %v63
    %v67 = vshrl.u32 2475754826, %v64
    %v68 = vor.u32 %v66, %v67
    %v69 = vshll.u32 2475754826, %v63
    %v70 = vshrl.u32 2131351028, %v64
    %v71 = vor.u32 %v69, %v70
    %v72 = vshll.u32 2131351028, %v63
    %v73 = vshrl.u32 2102212464, %v64
    %v74 = vor.u32 %v72, %v73
    %v75 = vshll.u32 2102212464, %v63
    %v76 = vshrl.u32 920167782, %v64
    %v77 = vor.u32 %v75, %v76
    %v78 = vshll.u32 920167782, %v63
    %v79 = vshrl.u32 1326507024, %v64
    %v80 = vor.u32 %v78, %v79
    %vm81 = vcmp.lt.s32.totalorder %v62, 1
    %vm82 = vcmp.lt.s32.totalorder %v62, 2
    %vm83 = vcmp.lt.s32.totalorder %v62, 3
    %vm84 = vcmp.lt.s32.totalorder %v62, 4
    %v85 = vsel %vm81, %v65, %v68
    %v86 = vsel %vm84, %v74, 2102212464
    %v87 = vsel %vm83, %v71, %v86
    %v88 = vsel %vm82, %v85, %v87
    %v89 = vsel %vm81, %v68, %v71
    %v90 = vsel %vm84, %v77, 920167782
    %v91 = vsel %vm83, %v74, %v90
    %v92 = vsel %vm82, %v89, %v91
    %v93 = vsel %vm81, %v71, %v74
    %v94 = vsel %vm84, %v80, 1326507024
    %v95 = vsel %vm83, %v77, %v94
    %v96 = vsel %vm82, %v93, %v95
    %v97 = vshll.u32 %v57, 8
    %v98 = vmul.u32.u64.compose %v97, %v96
    %v99 = vextract.low.u32 %v98
    %v100 = vextract.high.u32 %v98
    %v101 = vmul.u32.u64.compose %v97, %v92
    %v102 = vextract.low.u32 %v101
    %v103 = vextract.high.u32 %v101
    %v104 = vmul.u32 %v97, %v88
    %v105 = vadd.s32 %v100, %v102
    %vm106 = vc.u32 %v100, %v102
    %v107 = vadd.s32 %v103, 1
    %v108 = vsel %vm106, %v107, %v103
    %v109 = vadd.s32 %v104, %v108
    %v110 = vadd.s32 %v109, 536870912
    %v111 = vshrl.u32 %v110, 30
    %v112 = vshll.u32 %v111, 30
    %v113 = vsub.s32 %v109, %v112
    %vm114 = vcmp.lt.s32.totalorder %v113, 0
    %v115 = vsub.s32 0, %v113
    %v116 = vsel %vm114, %v115, %v113
    %v117 = vclz %v116
    %v118 = vsub.s32 %v117, 2
    %vm119 = vcmp.gt.s32.totalorder 0, %v118
    %v120 = vsel %vm119, 0, %v118
    %v121 = vsub.s32 32, %v120
    %v122 = vshll.u32 %v113, %v120
    %v123 = vshrl.u32 %v105, %v121
    %v124 = vor.u32 %v122, %v123
    %v125 = vsub.s32 4294967266, %v120
    %v126 = vadd.s32 %v125, 127
    %v127 = vshll.u32 %v126, 23
    %v128 = vor.u32 4788187, %v127
    %v129 = vand.u32 2147483647, %v128
    %v131 = vcvt.s32.f32 %v124
    %v132 = vmul.f32 %v131, %v129
    %v133 = vxor.u32 %v132, 2147483648
    %v134 = vsel %vm51, %v133, %v132
    %v135 = vsub.s32 4, %v111
    %v136 = vsel %vm51, %v135, %v111
    %v137 = vsel %vm50, %v47, %v134
    %v138 = vsel %vm50, 0, %v136
    %v139 = vcosq.f32.pop %v137
    %v140 = vsinq.f32.pop %v137
    %vm141 = vweird.f32 %v47
    %v142 = vadd.s32 %v138, 3
    %v143 = vand.u32 %v142, 3
    %vm144 = vcmp.lt.s32.totalorder %v143, 2
    %vm145 = vcmp.eq.s32.totalorder %v143, 0
    %v146 = vxor.u32 %v140, 2147483648
    %v147 = vsel %vm145, %v139, %v146
    %vm148 = vcmp.eq.s32.totalorder %v143, 2
    %v149 = vxor.u32 %v139, 2147483648
    %v150 = vsel %vm148, %v149, %v140
    %v151 = vsel %vm144, %v147, %v150
    %v152 = vsel %vm141, nan, %v151
    %v153 = vand.u32 2147483647, %v48
    %vm154 = vcmp.le.f32.partialorder %v153, 0.7853982
    %vm155 = vcmp.lt.s32.totalorder %v48, 0
    %v156 = vand.u32 %v48, 2139095040
    %v157 = vshrl.u32 %v156, 23
    %v158 = vsub.s32 %v157, 127
    %v159 = vand.u32 2147483647, %v48
    %v160 = vand.u32 %v159, 8388607
    %v161 = vor.u32 %v160, 8388608
    %v162 = vsub.s32 0, %v161
    %v163 = vadd.s32 %v158, 1
    %vm164 = vcmp.gt.s32.totalorder %v163, 0
    %v165 = vsel %vm164, %v163, 0
    %v166 = vshrl.u32 %v165, 5
    %v167 = vand.u32 %v165, 31
    %v168 = vsub.s32 32, %v167
    %v169 = vshrl.u32 683565275, %v168
    %v170 = vshll.u32 683565275, %v167
    %v171 = vshrl.u32 2475754826, %v168
    %v172 = vor.u32 %v170, %v171
    %v173 = vshll.u32 2475754826, %v167
    %v174 = vshrl.u32 2131351028, %v168
    %v175 = vor.u32 %v173, %v174
    %v176 = vshll.u32 2131351028, %v167
    %v177 = vshrl.u32 2102212464, %v168
    %v178 = vor.u32 %v176, %v177
    %v179 = vshll.u32 2102212464, %v167
    %v180 = vshrl.u32 920167782, %v168
    %v181 = vor.u32 %v179, %v180
    %v182 = vshll.u32 920167782, %v167
    %v183 = vshrl.u32 1326507024, %v168
    %v184 = vor.u32 %v182, %v183
    %vm185 = vcmp.lt.s32.totalorder %v166, 1
    %vm186 = vcmp.lt.s32.totalorder %v166, 2
    %vm187 = vcmp.lt.s32.totalorder %v166, 3
    %vm188 = vcmp.lt.s32.totalorder %v166, 4
    %v189 = vsel %vm185, %v169, %v172
    %v190 = vsel %vm188, %v178, 2102212464
    %v191 = vsel %vm187, %v175, %v190
    %v192 = vsel %vm186, %v189, %v191
    %v193 = vsel %vm185, %v172, %v175
    %v194 = vsel %vm188, %v181, 920167782
    %v195 = vsel %vm187, %v178, %v194
    %v196 = vsel %vm186, %v193, %v195
    %v197 = vsel %vm185, %v175, %v178
    %v198 = vsel %vm188, %v184, 1326507024
    %v199 = vsel %vm187, %v181, %v198
    %v200 = vsel %vm186, %v197, %v199
    %v201 = vshll.u32 %v161, 8
    %v202 = vmul.u32.u64.compose %v201, %v200
    %v203 = vextract.low.u32 %v202
    %v204 = vextract.high.u32 %v202
    %v205 = vmul.u32.u64.compose %v201, %v196
    %v206 = vextract.low.u32 %v205
    %v207 = vextract.high.u32 %v205
    %v208 = vmul.u32 %v201, %v192
    %v209 = vadd.s32 %v204, %v206
    %vm210 = vc.u32 %v204, %v206
    %v211 = vadd.s32 %v207, 1
    %v212 = vsel %vm210, %v211, %v207
    %v213 = vadd.s32 %v208, %v212
    %v214 = vadd.s32 %v213, 536870912
    %v215 = vshrl.u32 %v214, 30
    %v216 = vshll.u32 %v215, 30
    %v217 = vsub.s32 %v213, %v216
    %vm218 = vcmp.lt.s32.totalorder %v217, 0
    %v219 = vsub.s32 0, %v217
    %v220 = vsel %vm218, %v219, %v217
    %v221 = vclz %v220
    %v222 = vsub.s32 %v221, 2
    %vm223 = vcmp.gt.s32.totalorder 0, %v222
    %v224 = vsel %vm223, 0, %v222
    %v225 = vsub.s32 32, %v224
    %v226 = vshll.u32 %v217, %v224
    %v227 = vshrl.u32 %v209, %v225
    %v228 = vor.u32 %v226, %v227
    %v229 = vsub.s32 4294967266, %v224
    %v230 = vadd.s32 %v229, 127
    %v231 = vshll.u32 %v230, 23
    %v232 = vor.u32 4788187, %v231
    %v233 = vand.u32 2147483647, %v232
    %v235 = vcvt.s32.f32 %v228
    %v236 = vmul.f32 %v235, %v233
    %v237 = vxor.u32 %v236, 2147483648
    %v238 = vsel %vm155, %v237, %v236
    %v239 = vsub.s32 4, %v215
    %v240 = vsel %vm155, %v239, %v215
    %v241 = vsel %vm154, %v48, %v238
    %v242 = vsel %vm154, 0, %v240
    %v243 = vcosq.f32.pop %v241
    %v244 = vsinq.f32.pop %v241
    %vm245 = vweird.f32 %v48
    %v246 = vadd.s32 %v242, 3
    %v247 = vand.u32 %v246, 3
    %vm248 = vcmp.lt.s32.totalorder %v247, 2
    %vm249 = vcmp.eq.s32.totalorder %v247, 0
    %v250 = vxor.u32 %v244, 2147483648
    %v251 = vsel %vm249, %v243, %v250
    %vm252 = vcmp.eq.s32.totalorder %v247, 2
    %v253 = vxor.u32 %v243, 2147483648
    %v254 = vsel %vm252, %v253, %v244
    %v255 = vsel %vm248, %v251, %v254
    %v256 = vsel %vm245, nan, %v255
    %v257 = vstv %s37
    %v258 = vmul.f32 %v152, %v257
    %v259 = vmul.f32 %v256, %v257
    %v260 = vmul.f32 %v42, 12.0
    %v261 = vmul.f32 %v43, 12.0
    %v262 = vstv %s40
    %v263 = vadd.f32 %v260, %v262
    %v264 = vadd.f32 %v261, %v262
    %v265 = vand.u32 2147483647, %v263
    %vm266 = vcmp.le.f32.partialorder %v265, 0.7853982
    %vm267 = vcmp.lt.s32.totalorder %v263, 0
    %v268 = vand.u32 %v263, 2139095040
    %v269 = vshrl.u32 %v268, 23
    %v270 = vsub.s32 %v269, 127
    %v271 = vand.u32 2147483647, %v263
    %v272 = vand.u32 %v271, 8388607
    %v273 = vor.u32 %v272, 8388608
    %v274 = vsub.s32 0, %v273
    %v275 = vadd.s32 %v270, 1
    %vm276 = vcmp.gt.s32.totalorder %v275, 0
    %v277 = vsel %vm276, %v275, 0
    %v278 = vshrl.u32 %v277, 5
    %v279 = vand.u32 %v277, 31
    %v280 = vsub.s32 32, %v279
    %v281 = vshrl.u32 683565275, %v280
    %v282 = vshll.u32 683565275, %v279
    %v283 = vshrl.u32 2475754826, %v280
    %v284 = vor.u32 %v282, %v283
    %v285 = vshll.u32 2475754826, %v279
    %v286 = vshrl.u32 2131351028, %v280
    %v287 = vor.u32 %v285, %v286
    %v288 = vshll.u32 2131351028, %v279
    %v289 = vshrl.u32 2102212464, %v280
    %v290 = vor.u32 %v288, %v289
    %v291 = vshll.u32 2102212464, %v279
    %v292 = vshrl.u32 920167782, %v280
    %v293 = vor.u32 %v291, %v292
    %v294 = vshll.u32 920167782, %v279
    %v295 = vshrl.u32 1326507024, %v280
    %v296 = vor.u32 %v294, %v295
    %vm297 = vcmp.lt.s32.totalorder %v278, 1
    %vm298 = vcmp.lt.s32.totalorder %v278, 2
    %vm299 = vcmp.lt.s32.totalorder %v278, 3
    %vm300 = vcmp.lt.s32.totalorder %v278, 4
    %v301 = vsel %vm297, %v281, %v284
    %v302 = vsel %vm300, %v290, 2102212464
    %v303 = vsel %vm299, %v287, %v302
    %v304 = vsel %vm298, %v301, %v303
    %v305 = vsel %vm297, %v284, %v287
    %v306 = vsel %vm300, %v293, 920167782
    %v307 = vsel %vm299, %v290, %v306
    %v308 = vsel %vm298, %v305, %v307
    %v309 = vsel %vm297, %v287, %v290
    %v310 = vsel %vm300, %v296, 1326507024
    %v311 = vsel %vm299, %v293, %v310
    %v312 = vsel %vm298, %v309, %v311
    %v313 = vshll.u32 %v273, 8
    %v314 = vmul.u32.u64.compose %v313, %v312
    %v315 = vextract.low.u32 %v314
    %v316 = vextract.high.u32 %v314
    %v317 = vmul.u32.u64.compose %v313, %v308
    %v318 = vextract.low.u32 %v317
    %v319 = vextract.high.u32 %v317
    %v320 = vmul.u32 %v313, %v304
    %v321 = vadd.s32 %v316, %v318
    %vm322 = vc.u32 %v316, %v318
    %v323 = vadd.s32 %v319, 1
    %v324 = vsel %vm322, %v323, %v319
    %v325 = vadd.s32 %v320, %v324
    %v326 = vadd.s32 %v325, 536870912
    %v327 = vshrl.u32 %v326, 30
    %v328 = vshll.u32 %v327, 30
    %v329 = vsub.s32 %v325, %v328
    %vm330 = vcmp.lt.s32.totalorder %v329, 0
    %v331 = vsub.s32 0, %v329
    %v332 = vsel %vm330, %v331, %v329
    %v333 = vclz %v332
    %v334 = vsub.s32 %v333, 2
    %vm335 = vcmp.gt.s32.totalorder 0, %v334
    %v336 = vsel %vm335, 0, %v334
    %v337 = vsub.s32 32, %v336
    %v338 = vshll.u32 %v329, %v336
    %v339 = vshrl.u32 %v321, %v337
    %v340 = vor.u32 %v338, %v339
    %v341 = vsub.s32 4294967266, %v336
    %v342 = vadd.s32 %v341, 127
    %v343 = vshll.u32 %v342, 23
    %v344 = vor.u32 4788187, %v343
    %v345 = vand.u32 2147483647, %v344
    %v347 = vcvt.s32.f32 %v340
    %v348 = vmul.f32 %v347, %v345
    %v349 = vxor.u32 %v348, 2147483648
    %v350 = vsel %vm267, %v349, %v348
    %v351 = vsub.s32 4, %v327
    %v352 = vsel %vm267, %v351, %v327
    %v353 = vsel %vm266, %v263, %v350
    %v354 = vsel %vm266, 0, %v352
    %v355 = vcosq.f32.pop %v353
    %v356 = vsinq.f32.pop %v353
    %vm357 = vweird.f32 %v263
    %v358 = vadd.s32 %v354, 3
    %v359 = vand.u32 %v358, 3
    %vm360 = vcmp.lt.s32.totalorder %v359, 2
    %vm361 = vcmp.eq.s32.totalorder %v359, 0
    %v362 = vxor.u32 %v356, 2147483648
    %v363 = vsel %vm361, %v355, %v362
    %vm364 = vcmp.eq.s32.totalorder %v359, 2
    %v365 = vxor.u32 %v355, 2147483648
    %v366 = vsel %vm364, %v365, %v356
    %v367 = vsel %vm360, %v363, %v366
    %v368 = vsel %vm357, nan, %v367
    %v369 = vand.u32 2147483647, %v264
    %vm370 = vcmp.le.f32.partialorder %v369, 0.7853982
    %vm371 = vcmp.lt.s32.totalorder %v264, 0
    %v372 = vand.u32 %v264, 2139095040
    %v373 = vshrl.u32 %v372, 23
    %v374 = vsub.s32 %v373, 127
    %v375 = vand.u32 2147483647, %v264
    %v376 = vand.u32 %v375, 8388607
    %v377 = vor.u32 %v376, 8388608
    %v378 = vsub.s32 0, %v377
    %v379 = vadd.s32 %v374, 1
    %vm380 = vcmp.gt.s32.totalorder %v379, 0
    %v381 = vsel %vm380, %v379, 0
    %v382 = vshrl.u32 %v381, 5
    %v383 = vand.u32 %v381, 31
    %v384 = vsub.s32 32, %v383
    %v385 = vshrl.u32 683565275, %v384
    %v386 = vshll.u32 683565275, %v383
    %v387 = vshrl.u32 2475754826, %v384
    %v388 = vor.u32 %v386, %v387
    %v389 = vshll.u32 2475754826, %v383
    %v390 = vshrl.u32 2131351028, %v384
    %v391 = vor.u32 %v389, %v390
    %v392 = vshll.u32 2131351028, %v383
    %v393 = vshrl.u32 2102212464, %v384
    %v394 = vor.u32 %v392, %v393
    %v395 = vshll.u32 2102212464, %v383
    %v396 = vshrl.u32 920167782, %v384
    %v397 = vor.u32 %v395, %v396
    %v398 = vshll.u32 920167782, %v383
    %v399 = vshrl.u32 1326507024, %v384
    %v400 = vor.u32 %v398, %v399
    %vm401 = vcmp.lt.s32.totalorder %v382, 1
    %vm402 = vcmp.lt.s32.totalorder %v382, 2
    %vm403 = vcmp.lt.s32.totalorder %v382, 3
    %vm404 = vcmp.lt.s32.totalorder %v382, 4
    %v405 = vsel %vm401, %v385, %v388
    %v406 = vsel %vm404, %v394, 2102212464
    %v407 = vsel %vm403, %v391, %v406
    %v408 = vsel %vm402, %v405, %v407
    %v409 = vsel %vm401, %v388, %v391
    %v410 = vsel %vm404, %v397, 920167782
    %v411 = vsel %vm403, %v394, %v410
    %v412 = vsel %vm402, %v409, %v411
    %v413 = vsel %vm401, %v391, %v394
    %v414 = vsel %vm404, %v400, 1326507024
    %v415 = vsel %vm403, %v397, %v414
    %v416 = vsel %vm402, %v413, %v415
    %v417 = vshll.u32 %v377, 8
    %v418 = vmul.u32.u64.compose %v417, %v416
    %v419 = vextract.low.u32 %v418
    %v420 = vextract.high.u32 %v418
    %v421 = vmul.u32.u64.compose %v417, %v412
    %v422 = vextract.low.u32 %v421
    %v423 = vextract.high.u32 %v421
    %v424 = vmul.u32 %v417, %v408
    %v425 = vadd.s32 %v420, %v422
    %vm426 = vc.u32 %v420, %v422
    %v427 = vadd.s32 %v423, 1
    %v428 = vsel %vm426, %v427, %v423
    %v429 = vadd.s32 %v424, %v428
    %v430 = vadd.s32 %v429, 536870912
    %v431 = vshrl.u32 %v430, 30
    %v432 = vshll.u32 %v431, 30
    %v433 = vsub.s32 %v429, %v432
    %vm434 = vcmp.lt.s32.totalorder %v433, 0
    %v435 = vsub.s32 0, %v433
    %v436 = vsel %vm434, %v435, %v433
    %v437 = vclz %v436
    %v438 = vsub.s32 %v437, 2
    %vm439 = vcmp.gt.s32.totalorder 0, %v438
    %v440 = vsel %vm439, 0, %v438
    %v441 = vsub.s32 32, %v440
    %v442 = vshll.u32 %v433, %v440
    %v443 = vshrl.u32 %v425, %v441
    %v444 = vor.u32 %v442, %v443
    %v445 = vsub.s32 4294967266, %v440
    %v446 = vadd.s32 %v445, 127
    %v447 = vshll.u32 %v446, 23
    %v448 = vor.u32 4788187, %v447
    %v449 = vand.u32 2147483647, %v448
    %v451 = vcvt.s32.f32 %v444
    %v452 = vmul.f32 %v451, %v449
    %v453 = vxor.u32 %v452, 2147483648
    %v454 = vsel %vm371, %v453, %v452
    %v455 = vsub.s32 4, %v431
    %v456 = vsel %vm371, %v455, %v431
    %v457 = vsel %vm370, %v264, %v454
    %v458 = vsel %vm370, 0, %v456
    %v459 = vcosq.f32.pop %v457
    %v460 = vsinq.f32.pop %v457
    %vm461 = vweird.f32 %v264
    %v462 = vadd.s32 %v458, 3
    %v463 = vand.u32 %v462, 3
    %vm464 = vcmp.lt.s32.totalorder %v463, 2
    %vm465 = vcmp.eq.s32.totalorder %v463, 0
    %v466 = vxor.u32 %v460, 2147483648
    %v467 = vsel %vm465, %v459, %v466
    %vm468 = vcmp.eq.s32.totalorder %v463, 2
    %v469 = vxor.u32 %v459, 2147483648
    %v470 = vsel %vm468, %v469, %v460
    %v471 = vsel %vm464, %v467, %v470
    %v472 = vsel %vm461, nan, %v471
    %v473 = vstv %s38
    %v474 = vmul.f32 %v368, %v473
    %v475 = vmul.f32 %v472, %v473
    %v476 = vadd.f32 %v258, %v474
    %v477 = vadd.f32 %v259, %v475
    %v478 = vstv %s41
    %v479 = vadd.f32 %v476, %v478
    %v480 = vadd.f32 %v477, %v478
    %481 = vst [vmem:[#allocation7] sm:$0xff] %v479
    %482 = vst [vmem:[#allocation7 + $0x8] sm:$0xff] %v480
    // Predicated region
    $region18: #{tpu_custom_call.1} parent=1 // pred_check
      _
    $region19: #{tpu_custom_call.1} parent=1 // pred_check_branch
      %484 = sbr.rel (0) target = $region21
    $region20: #{tpu_custom_call.1} parent=1 // pred_region
      %s486 = ssub.s32 256, 256
      %487 = vsyncadd [#allocation4], %s486
      %s488 = sshll.u32 [#allocation7], 4
      %s489 = int_to_ptr.vmem [resolvable:$true] %s488
      %494 = dma.vmem_to_hbm [thread:$0]  %s489, 256, %s2, [#allocation4], 128, 128, 8
    $region21: #{tpu_custom_call.1} parent=1 // pred_fallthru
      _
    // Predicated region
    $region22: #{tpu_custom_call.1} parent=1 // pred_check
      _
    $region23: #{tpu_custom_call.1} parent=1 // pred_check_branch
      %496 = sbr.rel (0) target = $region25
    $region24: #{tpu_custom_call.1} parent=1 // pred_region
      %497 = dma.done [#allocation4], 256
    $region25: #{tpu_custom_call.1} parent=1 // pred_fallthru
      _
    %498 = vsyncpa [#allocation3], 1
    %499 = vsyncpa [#allocation4], 1
    %500 = vsyncpa [#allocation5], 1

</llo_original>
